<compile_context>
chip_gen: v5e
topology: v5e:2x2
jax: 0.10.0
libtpu: 0.0.40
codegen_flags: <defaults>
</compile_context>

<pallas_src>
import functools
import math

import numpy as np
import jax
import jax.numpy as jnp
from jax import lax
from jax.experimental import pallas as pl
from jax.experimental.pallas import tpu as pltpu


def _pos_enc_kernel(pos_ref, out_ref, emb_ref, *, C, Ch, F, neg_log_base):
    """One grid step = (spatial tile j, batch tile b).

    pos_ref: (2, thw) float32. Row 0 = x index (p // W), row 1 = y index (p % W) of the
             flattened positions covered by spatial tile j.
    out_ref: (tb, C, thw) block of the flattened (B, C, H*W) output.
    emb_ref: (C, thw) VMEM scratch (output dtype); persists across grid steps.
    """

    @pl.when(pl.program_id(1) == 0)          # batch axis is innermost -> once per tile j
    def _compute_encoding_tile():
        xi = pos_ref[0:1, :]                                               # (1, thw)
        yi = pos_ref[1:2, :]                                               # (1, thw)
        k = lax.broadcasted_iota(jnp.int32, (F, 1), 0).astype(jnp.float32)
        inv_freq = jnp.exp(k * neg_log_base)                               # 1/10000**(2k/Ch)
        sin_inp_x = xi * inv_freq                                          # (F, thw)
        sin_inp_y = yi * inv_freq                                          # (F, thw)
        emb_x = jnp.concatenate([jnp.sin(sin_inp_x), jnp.cos(sin_inp_x)], axis=0)  # (Ch, thw)
        emb_y = jnp.concatenate([jnp.sin(sin_inp_y), jnp.cos(sin_inp_y)], axis=0)  # (Ch, thw)
        emb = jnp.concatenate([emb_x, emb_y[: C - Ch]], axis=0)            # (C, thw)
        emb_ref[...] = emb.astype(emb_ref.dtype)                           # cast pre-broadcast

    # Replay the cached encoding tile for every batch element in this block (pure stores).
    out_ref[...] = jnp.broadcast_to(emb_ref[...], out_ref.shape)


def _choose_spatial_tile(HW, C, itemsize, target_bytes):
    """Lane-dense tile of the flattened H*W axis with C*thw*itemsize ~<= target_bytes."""
    if C * HW * itemsize <= target_bytes or HW <= 128:
        return int(HW)
    thw = max(128, (target_bytes // (C * itemsize)) // 128 * 128)
    return int(min(thw, HW))


def _choose_batch_tile(B, C, thw, itemsize, target_bytes):
    """Fold batches into one block when per-batch slabs are small (amortize step overhead)."""
    per_batch = max(1, C * thw * itemsize)
    return int(max(1, min(B, target_bytes // per_batch)))


def positional_encoding_permute_2d(x, *, block_target_bytes=2 * 1024 * 1024):
    """Pallas equivalent of PositionalEncodingPermute2D(C)(x) for x of shape (B, C, H, W)."""
    B, C, H, W = x.shape
    Ch = int(np.ceil(C / 2))             # spec module: channels = ceil(C / 2)
    F = len(range(0, Ch, 2))             # = ceil(Ch / 2) = len(inv_freq)
    if 2 * F != Ch:
        # Mirrors the reference module, which fails broadcasting emb_x (last dim 2*F)
        # into emb[..., :Ch] whenever ceil(C/2) is odd.
        raise ValueError(
            f"channels={C}: ceil(C/2)={Ch} is odd; the reference PyTorch module cannot "
            "broadcast emb_x into emb for this channel count.")

    HW = H * W
    itemsize = np.dtype(x.dtype).itemsize
    thw = _choose_spatial_tile(HW, C, itemsize, block_target_bytes)
    tb = _choose_batch_tile(B, C, thw, itemsize, block_target_bytes)
    n_hw = pl.cdiv(HW, thw)
    n_b = pl.cdiv(B, tb)

    # Trace-time (x, y) coordinate table for flattened positions p = h*W + w.
    p = np.arange(HW, dtype=np.int64)
    pos = jnp.asarray(np.stack([p // W, p % W]).astype(np.float32))        # (2, HW)

    kernel = functools.partial(
        _pos_enc_kernel, C=C, Ch=Ch, F=F,
        neg_log_base=-2.0 * math.log(10000.0) / Ch)

    out_flat = pl.pallas_call(
        kernel,
        out_shape=jax.ShapeDtypeStruct((B, C, HW), x.dtype),
        grid=(n_hw, n_b),
        in_specs=[pl.BlockSpec((2, thw), lambda j, b: (0, j))],
        out_specs=pl.BlockSpec((tb, C, thw), lambda j, b: (b, 0, j)),
        scratch_shapes=[pltpu.VMEM((C, thw), x.dtype)],
        compiler_params=pltpu.CompilerParams(
            # Spatial tiles are independent (megacore-shardable); the batch axis carries
            # the VMEM scratch so it must stay sequential.
            dimension_semantics=("parallel", "arbitrary"),
            vmem_limit_bytes=32 * 1024 * 1024,
        ),
    )(pos)
    return out_flat.reshape(B, C, H, W)


def _reference_numpy(x):
    """Pure-numpy replica of the PyTorch forward (float64 internally)."""
    B, C, H, W = x.shape
    Ch = int(np.ceil(C / 2))
    inv_freq = 1.0 / (10000.0 ** (np.arange(0, Ch, 2, dtype=np.float64) / float(Ch)))
    sin_x = np.arange(H, dtype=np.float64)[:, None] * inv_freq[None, :]
    sin_y = np.arange(W, dtype=np.float64)[:, None] * inv_freq[None, :]
    emb_x = np.concatenate([np.sin(sin_x), np.cos(sin_x)], axis=-1)        # (H, Ch)
    emb_y = np.concatenate([np.sin(sin_y), np.cos(sin_y)], axis=-1)        # (W, Ch)
    emb = np.zeros((H, W, 2 * Ch), dtype=np.float64)
    emb[:, :, :Ch] = emb_x[:, None, :]
    emb[:, :, Ch:] = emb_y[None, :, :]
    enc = np.broadcast_to(emb[None, :, :, :C], (B, H, W, C))
    return np.transpose(enc, (0, 3, 1, 2)).astype(x.dtype)                 # (B, C, H, W)


if __name__ == "__main__":
    key = jax.random.PRNGKey(0)

    # Primary shape (B, C, H, W) = (2, 4, 16, 16); input values are unused by the module.
    x = jax.random.normal(key, (2, 4, 16, 16), dtype=jnp.float32)
    out = jax.block_until_ready(positional_encoding_permute_2d(x))
    np.testing.assert_allclose(np.asarray(out), _reference_numpy(np.asarray(x)),
                               rtol=1e-5, atol=1e-5)

    # Same shape, but force spatial + batch tiling (exercises the scratch-reuse path).
    out_tiled = jax.block_until_ready(
        positional_encoding_permute_2d(x, block_target_bytes=2048))
    np.testing.assert_allclose(np.asarray(out_tiled), _reference_numpy(np.asarray(x)),
                               rtol=1e-5, atol=1e-5)

    # Odd channel count / non-square spatial coverage.
    x2 = jax.random.normal(jax.random.PRNGKey(0), (3, 3, 8, 12), dtype=jnp.float32)
    out2 = jax.block_until_ready(positional_encoding_permute_2d(x2))
    np.testing.assert_allclose(np.asarray(out2), _reference_numpy(np.asarray(x2)),
                               rtol=1e-5, atol=1e-5)

    print("KERNEL_OK")
</pallas_src>

<mosaic_0001>
module attributes {stable_mosaic.version = 11 : i64} {
  func.func @_pos_enc_kernel(%arg0: i32, %arg1: i32, %arg2: memref<2x256xf32, #tpu.memory_space<vmem>>, %arg3: memref<2x4x256xf32, #tpu.memory_space<vmem>>, %arg4: memref<4x256xf32, #tpu.memory_space<vmem>>) attributes {dimension_semantics = [#tpu.dimension_semantics<parallel>, #tpu.dimension_semantics<arbitrary>], iteration_bounds = array<i64: 1, 1>, scalar_prefetch = 0 : i64, scratch_operands = 1 : i64, tpu.core_type = #tpu.core_type<tc>, window_params = [{transform_indices = @transform_0, window_bounds = array<i64: 2, 256>}, {transform_indices = @transform_1, window_bounds = array<i64: 2, 4, 256>}]} {
    %c0_i32 = arith.constant 0 : i32
    %0 = arith.cmpi eq, %arg1, %c0_i32 : i32
    %1 = arith.extui %0 : i1 to i32
    %c0_i32_0 = arith.constant 0 : i32
    %2 = arith.cmpi ne, %1, %c0_i32_0 : i32
    scf.if %2 {
      %c0_5 = arith.constant 0 : index
      %c0_6 = arith.constant 0 : index
      %7 = vector.load %arg2[%c0_5, %c0_6] : memref<2x256xf32, #tpu.memory_space<vmem>>, vector<1x256xf32>
      %c1 = arith.constant 1 : index
      %c0_7 = arith.constant 0 : index
      %8 = vector.load %arg2[%c1, %c0_7] : memref<2x256xf32, #tpu.memory_space<vmem>>, vector<1x256xf32>
      %9 = tpu.iota {dimensions = array<i32: 0>} : vector<1x1xi32>
      %10 = arith.sitofp %9 : vector<1x1xi32> to vector<1x1xf32>
      %cst = arith.constant -9.21034049 : f32
      %11 = vector.broadcast %cst : f32 to vector<1x1xf32>
      %12 = arith.mulf %10, %11 : vector<1x1xf32>
      %13 = math.exp %12 : vector<1x1xf32>
      %14 = vector.broadcast %13 : vector<1x1xf32> to vector<1x256xf32>
      %15 = arith.mulf %7, %14 : vector<1x256xf32>
      %16 = vector.broadcast %13 : vector<1x1xf32> to vector<1x256xf32>
      %17 = arith.mulf %8, %16 : vector<1x256xf32>
      %18 = math.sin %15 : vector<1x256xf32>
      %19 = math.cos %15 : vector<1x256xf32>
      %20 = tpu.concatenate %18, %19 in 0 : vector<1x256xf32>, vector<1x256xf32> -> vector<2x256xf32>
      %21 = math.sin %17 : vector<1x256xf32>
      %22 = math.cos %17 : vector<1x256xf32>
      %23 = tpu.concatenate %21, %22 in 0 : vector<1x256xf32>, vector<1x256xf32> -> vector<2x256xf32>
      %24 = tpu.concatenate %20, %23 in 0 : vector<2x256xf32>, vector<2x256xf32> -> vector<4x256xf32>
      %c0_8 = arith.constant 0 : index
      %c0_9 = arith.constant 0 : index
      %25 = vector.load %arg4[%c0_8, %c0_9] : memref<4x256xf32, #tpu.memory_space<vmem>>, vector<4x256xf32>
      tpu.vector_store %arg4[%c0_8, %c0_9], %24 {strides = array<i32>} : memref<4x256xf32, #tpu.memory_space<vmem>>, vector<4x256xf32>,
    } else {
    }
    %c0 = arith.constant 0 : index
    %c0_1 = arith.constant 0 : index
    %3 = vector.load %arg4[%c0, %c0_1] : memref<4x256xf32, #tpu.memory_space<vmem>>, vector<4x256xf32>
    %4 = vector.shape_cast %3 : vector<4x256xf32> to vector<1x4x256xf32>
    %5 = vector.broadcast %4 : vector<1x4x256xf32> to vector<2x4x256xf32>
    %c0_2 = arith.constant 0 : index
    %c0_3 = arith.constant 0 : index
    %c0_4 = arith.constant 0 : index
    %6 = vector.load %arg3[%c0_2, %c0_3, %c0_4] : memref<2x4x256xf32, #tpu.memory_space<vmem>>, vector<2x4x256xf32>
    tpu.vector_store %arg3[%c0_2, %c0_3, %c0_4], %5 {strides = array<i32>} : memref<2x4x256xf32, #tpu.memory_space<vmem>>, vector<2x4x256xf32>,
    return
  }
  func.func @transform_0(%arg0: i32, %arg1: i32) -> (i32, i32) {
    %c0_i32 = arith.constant 0 : i32
    %c0_i32_0 = arith.constant 0 : i32
    return %c0_i32, %arg0 : i32, i32
  }
  func.func @transform_1(%arg0: i32, %arg1: i32) -> (i32, i32, i32) {
    %c0_i32 = arith.constant 0 : i32
    %c0_i32_0 = arith.constant 0 : i32
    return %arg1, %c0_i32, %arg0 : i32, i32, i32
  }
}

</mosaic_0001>

<llo_original>
// kernel: tpu_custom_call.1
$region0: #{tpu_custom_call.1}
  #allocation0 [shape = 'u32[]', space=smem, size = 0x4, offset = 0x4, fixed_abs, tag = 'smem constant byte address 0x4 - core index']
  #allocation1 [shape = 'u32[72,128]{1,0:T(1,128)}', space=vmem, size = 0x9000, scoped, tag = 'internal scratch']
  #allocation2 [shape = 'f32[4,256]{1,0:T(4,128)}', space=vmem, size = 0x1000, scoped, tag = 'scratch operand']
  %s0 = inlined_call_operand.hbm [shape: f32[2,256], index: 0, kind: input, shape index: {}]
  %s1 = inlined_call_operand.hbm [shape: f32[2,4,256], index: 1, kind: output, shape index: {}]
  %s2 = sld [smem:[#allocation0]]
  $region22: #{tpu_custom_call.1} parent=0
    _
  %s4 = ssub.s32 1, %s2
  %s5 = scalar_select 0, %s4, %s2
  $region1: #{tpu_custom_call.1} parent=0
    #allocation3 [shape = 'u8[2048]{0}', space=vmem, size = 0x800, scoped, tag = 'input window, operand 0, single buffered']
    #allocation4 [shape = 's32[1]{0}', space=sflag, size = 0x4, scoped, tag = 'scoped memory for tpu_custom_call.1']
    #allocation5 [shape = 's32[1]{0}', space=sflag, size = 0x4, scoped, tag = 'scoped memory for tpu_custom_call.1']
    #allocation6 [shape = 'u8[8192]{0}', space=vmem, size = 0x2000, scoped, tag = 'output window, operand 0, single buffered']
    %6 = vsyncpa [#allocation4], 0
    %7 = vsyncpa [#allocation5], 0
    // Predicated region
    $region2: #{tpu_custom_call.1} parent=1 // pred_check
      _
    $region3: #{tpu_custom_call.1} parent=1 // pred_check_branch
      %9 = sbr.rel (0) target = $region5
    $region4: #{tpu_custom_call.1} parent=1 // pred_region
      %11 = vsyncadd [#allocation4], 0
      %s13 = sshll.u32 %s0, 4
      %s14 = int_to_ptr.hbm [resolvable:$true] %s13
      %s15 = sshll.u32 [#allocation3], 4
      %s16 = int_to_ptr.vmem [resolvable:$true] %s15
      %18 = dma.hbm_to_vmem [thread:$0]  %s14, 64, %s16, [#allocation4]
    $region5: #{tpu_custom_call.1} parent=1 // pred_fallthru
      _
    // Predicated region
    $region6: #{tpu_custom_call.1} parent=1 // pred_check
      _
    $region7: #{tpu_custom_call.1} parent=1 // pred_check_branch
      %20 = sbr.rel (0) target = $region9
    $region8: #{tpu_custom_call.1} parent=1 // pred_region
      %22 = dma.done [#allocation4], 64
    $region9: #{tpu_custom_call.1} parent=1 // pred_fallthru
      _
    %p23 = scmp.eq.s32.totalorder 0, 0
    // Predicated region
    $region10: #{tpu_custom_call.1} parent=1 // pred_check
      %p24 = pneg %p23
    $region11: #{tpu_custom_call.1} parent=1 // pred_check_branch
      %26 = sbr.rel (%p24) target = $region13
    $region12: #{tpu_custom_call.1} parent=1 // pred_region
      %v27 = vld [vmem:[#allocation3] ss:$2 sm:$0x3]
      %s28 = scalar_lea.vmem [#allocation3], 1
      %v29 = vld [vmem:[%s28] ss:$2 sm:$0x3]
      %v30 = vlaneseq
      %v31 = vshrl.u32 %v30, 7
      %v32 = vcvt.s32.f32 %v31
      %v33 = vmul.f32 %v32, -9.2103405
      %v34 = vmul.f32 %v33, 1.442695
      %v35 = vpow.pop %v34
      %v37 = vperm.slane %v35, 0
      %v39 = vmul.f32 %v27, %v37
      %v40 = vmul.f32 %v29, %v37
      %v41 = vand.u32 2147483647, %v39
      %vm42 = vcmp.le.f32.partialorder %v41, 0.7853982
      %vm43 = vcmp.lt.s32.totalorder %v39, 0
      %v44 = vand.u32 %v39, 2139095040
      %v45 = vshrl.u32 %v44, 23
      %v46 = vsub.s32 %v45, 127
      %v47 = vand.u32 2147483647, %v39
      %v48 = vand.u32 %v47, 8388607
      %v49 = vor.u32 %v48, 8388608
      %v50 = vsub.s32 0, %v49
      %v51 = vadd.s32 %v46, 1
      %vm52 = vcmp.gt.s32.totalorder %v51, 0
      %v53 = vsel %vm52, %v51, 0
      %v54 = vshrl.u32 %v53, 5
      %v55 = vand.u32 %v53, 31
      %v56 = vsub.s32 32, %v55
      %v57 = vshrl.u32 683565275, %v56
      %v58 = vshll.u32 683565275, %v55
      %v59 = vshrl.u32 2475754826, %v56
      %v60 = vor.u32 %v58, %v59
      %v61 = vshll.u32 2475754826, %v55
      %v62 = vshrl.u32 2131351028, %v56
      %v63 = vor.u32 %v61, %v62
      %v64 = vshll.u32 2131351028, %v55
      %v65 = vshrl.u32 2102212464, %v56
      %v66 = vor.u32 %v64, %v65
      %v67 = vshll.u32 2102212464, %v55
      %v68 = vshrl.u32 920167782, %v56
      %v69 = vor.u32 %v67, %v68
      %v70 = vshll.u32 920167782, %v55
      %v71 = vshrl.u32 1326507024, %v56
      %v72 = vor.u32 %v70, %v71
      %vm73 = vcmp.lt.s32.totalorder %v54, 1
      %vm74 = vcmp.lt.s32.totalorder %v54, 2
      %vm75 = vcmp.lt.s32.totalorder %v54, 3
      %vm76 = vcmp.lt.s32.totalorder %v54, 4
      %v77 = vsel %vm73, %v57, %v60
      %v78 = vsel %vm76, %v66, 2102212464
      %v79 = vsel %vm75, %v63, %v78
      %v80 = vsel %vm74, %v77, %v79
      %v81 = vsel %vm73, %v60, %v63
      %v82 = vsel %vm76, %v69, 920167782
      %v83 = vsel %vm75, %v66, %v82
      %v84 = vsel %vm74, %v81, %v83
      %v85 = vsel %vm73, %v63, %v66
      %v86 = vsel %vm76, %v72, 1326507024
      %v87 = vsel %vm75, %v69, %v86
      %v88 = vsel %vm74, %v85, %v87
      %v89 = vshll.u32 %v49, 8
      %v90 = vand.u32 %v89, 65535
      %v91 = vshrl.u32 %v89, 16
      %v92 = vand.u32 %v88, 65535
      %v93 = vshrl.u32 %v88, 16
      %v94 = vmul.u32 %v90, %v92
      %v95 = vmul.u32 %v90, %v93
      %v96 = vmul.u32 %v91, %v92
      %v97 = vmul.u32 %v91, %v93
      %v98 = vshll.u32 %v95, 16
      %v99 = vshrl.u32 %v95, 16
      %v100 = vshll.u32 %v96, 16
      %v101 = vshrl.u32 %v96, 16
      %vm102 = vc.u32 %v94, %v98
      %v103 = vsel %vm102, 1, 0
      %v104 = vadd.s32 %v94, %v98
      %v105 = vadd.s32 %v97, %v103
      %vm106 = vc.u32 %v104, %v100
      %v107 = vsel %vm106, 1, 0
      %v108 = vadd.s32 %v104, %v100
      %v109 = vadd.s32 %v105, %v107
      %v110 = vadd.s32 %v109, %v99
      %v111 = vadd.s32 %v110, %v101
      %v112 = vand.u32 %v89, 65535
      %v113 = vshrl.u32 %v89, 16
      %v114 = vand.u32 %v84, 65535
      %v115 = vshrl.u32 %v84, 16
      %v116 = vmul.u32 %v112, %v114
      %v117 = vmul.u32 %v112, %v115
      %v118 = vmul.u32 %v113, %v114
      %v119 = vmul.u32 %v113, %v115
      %v120 = vshll.u32 %v117, 16
      %v121 = vshrl.u32 %v117, 16
      %v122 = vshll.u32 %v118, 16
      %v123 = vshrl.u32 %v118, 16
      %vm124 = vc.u32 %v116, %v120
      %v125 = vsel %vm124, 1, 0
      %v126 = vadd.s32 %v116, %v120
      %v127 = vadd.s32 %v119, %v125
      %vm128 = vc.u32 %v126, %v122
      %v129 = vsel %vm128, 1, 0
      %v130 = vadd.s32 %v126, %v122
      %v131 = vadd.s32 %v127, %v129
      %v132 = vadd.s32 %v131, %v121
      %v133 = vadd.s32 %v132, %v123
      %v134 = vmul.u32 %v89, %v80
      %v135 = vadd.s32 %v111, %v130
      %vm136 = vc.u32 %v111, %v130
      %v137 = vadd.s32 %v133, 1
      %v138 = vsel %vm136, %v137, %v133
      %v139 = vadd.s32 %v134, %v138
      %v140 = vadd.s32 %v139, 536870912
      %v141 = vshrl.u32 %v140, 30
      %v142 = vshll.u32 %v141, 30
      %v143 = vsub.s32 %v139, %v142
      %vm144 = vcmp.lt.s32.totalorder %v143, 0
      %v145 = vsub.s32 0, %v143
      %v146 = vsel %vm144, %v145, %v143
      %v147 = vclz %v146
      %v148 = vsub.s32 %v147, 2
      %vm149 = vcmp.gt.s32.totalorder 0, %v148
      %v150 = vsel %vm149, 0, %v148
      %v151 = vsub.s32 32, %v150
      %v152 = vshll.u32 %v143, %v150
      %v153 = vshrl.u32 %v135, %v151
      %v154 = vor.u32 %v152, %v153
      %v155 = vsub.s32 4294967266, %v150
      %v156 = vadd.s32 %v155, 127
      %v157 = vshll.u32 %v156, 23
      %v158 = vor.u32 4788187, %v157
      %v159 = vand.u32 2147483647, %v158
      %v161 = vcvt.s32.f32 %v154
      %v162 = vmul.f32 %v161, %v159
      %v163 = vxor.u32 %v162, 2147483648
      %v164 = vsel %vm43, %v163, %v162
      %v165 = vsub.s32 4, %v141
      %v166 = vsel %vm43, %v165, %v141
      %v167 = vsel %vm42, %v39, %v164
      %v168 = vsel %vm42, 0, %v166
      %v169 = vmul.f32 %v167, %v167
      %v170 = vmul.f32 %v169, -0.001358992
      %v171 = vadd.f32 %v170, 0.041655596
      %v172 = vmul.f32 %v169, %v171
      %v173 = vadd.f32 %v172, -0.4999988
      %v174 = vmul.f32 %v169, %v173
      %v175 = vadd.f32 1.0, %v174
      %v176 = vmul.f32 %v167, %v167
      %v177 = vmul.f32 %v176, -0.00019511016
      %v178 = vadd.f32 %v177, 0.008332121
      %v179 = vmul.f32 %v176, %v178
      %v180 = vadd.f32 %v179, -0.16666654
      %v181 = vmul.f32 %v176, %v180
      %v182 = vadd.f32 %v181, 1.0
      %v183 = vmul.f32 %v182, %v167
      %vm184 = vweird.f32 %v39
      %v185 = vadd.s32 %v168, 3
      %v186 = vand.u32 %v185, 3
      %vm187 = vcmp.lt.s32.totalorder %v186, 2
      %vm188 = vcmp.eq.s32.totalorder %v186, 0
      %v189 = vxor.u32 %v183, 2147483648
      %v190 = vsel %vm188, %v175, %v189
      %vm191 = vcmp.eq.s32.totalorder %v186, 2
      %v192 = vxor.u32 %v175, 2147483648
      %v193 = vsel %vm191, %v192, %v183
      %v194 = vsel %vm187, %v190, %v193
      %v195 = vsel %vm184, nan, %v194
      %v196 = vand.u32 2147483647, %v39
      %vm197 = vcmp.le.f32.partialorder %v196, 0.7853982
      %vm198 = vcmp.lt.s32.totalorder %v39, 0
      %v199 = vand.u32 %v39, 2139095040
      %v200 = vshrl.u32 %v199, 23
      %v201 = vsub.s32 %v200, 127
      %v202 = vand.u32 2147483647, %v39
      %v203 = vand.u32 %v202, 8388607
      %v204 = vor.u32 %v203, 8388608
      %v205 = vsub.s32 0, %v204
      %v206 = vadd.s32 %v201, 1
      %vm207 = vcmp.gt.s32.totalorder %v206, 0
      %v208 = vsel %vm207, %v206, 0
      %v209 = vshrl.u32 %v208, 5
      %v210 = vand.u32 %v208, 31
      %v211 = vsub.s32 32, %v210
      %v212 = vshrl.u32 683565275, %v211
      %v213 = vshll.u32 683565275, %v210
      %v214 = vshrl.u32 2475754826, %v211
      %v215 = vor.u32 %v213, %v214
      %v216 = vshll.u32 2475754826, %v210
      %v217 = vshrl.u32 2131351028, %v211
      %v218 = vor.u32 %v216, %v217
      %v219 = vshll.u32 2131351028, %v210
      %v220 = vshrl.u32 2102212464, %v211
      %v221 = vor.u32 %v219, %v220
      %v222 = vshll.u32 2102212464, %v210
      %v223 = vshrl.u32 920167782, %v211
      %v224 = vor.u32 %v222, %v223
      %v225 = vshll.u32 920167782, %v210
      %v226 = vshrl.u32 1326507024, %v211
      %v227 = vor.u32 %v225, %v226
      %vm228 = vcmp.lt.s32.totalorder %v209, 1
      %vm229 = vcmp.lt.s32.totalorder %v209, 2
      %vm230 = vcmp.lt.s32.totalorder %v209, 3
      %vm231 = vcmp.lt.s32.totalorder %v209, 4
      %v232 = vsel %vm228, %v212, %v215
      %v233 = vsel %vm231, %v221, 2102212464
      %v234 = vsel %vm230, %v218, %v233
      %v235 = vsel %vm229, %v232, %v234
      %v236 = vsel %vm228, %v215, %v218
      %v237 = vsel %vm231, %v224, 920167782
      %v238 = vsel %vm230, %v221, %v237
      %v239 = vsel %vm229, %v236, %v238
      %v240 = vsel %vm228, %v218, %v221
      %v241 = vsel %vm231, %v227, 1326507024
      %v242 = vsel %vm230, %v224, %v241
      %v243 = vsel %vm229, %v240, %v242
      %v244 = vshll.u32 %v204, 8
      %v245 = vand.u32 %v244, 65535
      %v246 = vshrl.u32 %v244, 16
      %v247 = vand.u32 %v243, 65535
      %v248 = vshrl.u32 %v243, 16
      %v249 = vmul.u32 %v245, %v247
      %v250 = vmul.u32 %v245, %v248
      %v251 = vmul.u32 %v246, %v247
      %v252 = vmul.u32 %v246, %v248
      %v253 = vshll.u32 %v250, 16
      %v254 = vshrl.u32 %v250, 16
      %v255 = vshll.u32 %v251, 16
      %v256 = vshrl.u32 %v251, 16
      %vm257 = vc.u32 %v249, %v253
      %v258 = vsel %vm257, 1, 0
      %v259 = vadd.s32 %v249, %v253
      %v260 = vadd.s32 %v252, %v258
      %vm261 = vc.u32 %v259, %v255
      %v262 = vsel %vm261, 1, 0
      %v263 = vadd.s32 %v259, %v255
      %v264 = vadd.s32 %v260, %v262
      %v265 = vadd.s32 %v264, %v254
      %v266 = vadd.s32 %v265, %v256
      %v267 = vand.u32 %v244, 65535
      %v268 = vshrl.u32 %v244, 16
      %v269 = vand.u32 %v239, 65535
      %v270 = vshrl.u32 %v239, 16
      %v271 = vmul.u32 %v267, %v269
      %v272 = vmul.u32 %v267, %v270
      %v273 = vmul.u32 %v268, %v269
      %v274 = vmul.u32 %v268, %v270
      %v275 = vshll.u32 %v272, 16
      %v276 = vshrl.u32 %v272, 16
      %v277 = vshll.u32 %v273, 16
      %v278 = vshrl.u32 %v273, 16
      %vm279 = vc.u32 %v271, %v275
      %v280 = vsel %vm279, 1, 0
      %v281 = vadd.s32 %v271, %v275
      %v282 = vadd.s32 %v274, %v280
      %vm283 = vc.u32 %v281, %v277
      %v284 = vsel %vm283, 1, 0
      %v285 = vadd.s32 %v281, %v277
      %v286 = vadd.s32 %v282, %v284
      %v287 = vadd.s32 %v286, %v276
      %v288 = vadd.s32 %v287, %v278
      %v289 = vmul.u32 %v244, %v235
      %v290 = vadd.s32 %v266, %v285
      %vm291 = vc.u32 %v266, %v285
      %v292 = vadd.s32 %v288, 1
      %v293 = vsel %vm291, %v292, %v288
      %v294 = vadd.s32 %v289, %v293
      %v295 = vadd.s32 %v294, 536870912
      %v296 = vshrl.u32 %v295, 30
      %v297 = vshll.u32 %v296, 30
      %v298 = vsub.s32 %v294, %v297
      %vm299 = vcmp.lt.s32.totalorder %v298, 0
      %v300 = vsub.s32 0, %v298
      %v301 = vsel %vm299, %v300, %v298
      %v302 = vclz %v301
      %v303 = vsub.s32 %v302, 2
      %vm304 = vcmp.gt.s32.totalorder 0, %v303
      %v305 = vsel %vm304, 0, %v303
      %v306 = vsub.s32 32, %v305
      %v307 = vshll.u32 %v298, %v305
      %v308 = vshrl.u32 %v290, %v306
      %v309 = vor.u32 %v307, %v308
      %v310 = vsub.s32 4294967266, %v305
      %v311 = vadd.s32 %v310, 127
      %v312 = vshll.u32 %v311, 23
      %v313 = vor.u32 4788187, %v312
      %v314 = vand.u32 2147483647, %v313
      %v316 = vcvt.s32.f32 %v309
      %v317 = vmul.f32 %v316, %v314
      %v318 = vxor.u32 %v317, 2147483648
      %v319 = vsel %vm198, %v318, %v317
      %v320 = vsub.s32 4, %v296
      %v321 = vsel %vm198, %v320, %v296
      %v322 = vsel %vm197, %v39, %v319
      %v323 = vsel %vm197, 0, %v321
      %v324 = vmul.f32 %v322, %v322
      %v325 = vmul.f32 %v324, -0.001358992
      %v326 = vadd.f32 %v325, 0.041655596
      %v327 = vmul.f32 %v324, %v326
      %v328 = vadd.f32 %v327, -0.4999988
      %v329 = vmul.f32 %v324, %v328
      %v330 = vadd.f32 1.0, %v329
      %v331 = vmul.f32 %v322, %v322
      %v332 = vmul.f32 %v331, -0.00019511016
      %v333 = vadd.f32 %v332, 0.008332121
      %v334 = vmul.f32 %v331, %v333
      %v335 = vadd.f32 %v334, -0.16666654
      %v336 = vmul.f32 %v331, %v335
      %v337 = vadd.f32 %v336, 1.0
      %v338 = vmul.f32 %v337, %v322
      %vm339 = vweird.f32 %v39
      %v340 = vand.u32 %v323, 3
      %vm341 = vcmp.lt.s32.totalorder %v340, 2
      %vm342 = vcmp.eq.s32.totalorder %v340, 0
      %v343 = vxor.u32 %v338, 2147483648
      %v344 = vsel %vm342, %v330, %v343
      %vm345 = vcmp.eq.s32.totalorder %v340, 2
      %v346 = vxor.u32 %v330, 2147483648
      %v347 = vsel %vm345, %v346, %v338
      %v348 = vsel %vm341, %v344, %v347
      %v349 = vsel %vm339, nan, %v348
      %v351 = vperm.slane %v195, 0
      %v352 = vperm.slane %v195, 1
      %v356 = vperm.slane %v349, 0
      %v357 = vperm.slane %v349, 1
      %vm360 = vcmask 1040384
      %v361 = vsel %vm360, %v351, %v356
      %v362 = vsel %vm360, %v352, %v357
      %v363 = vand.u32 2147483647, %v40
      %vm364 = vcmp.le.f32.partialorder %v363, 0.7853982
      %vm365 = vcmp.lt.s32.totalorder %v40, 0
      %v366 = vand.u32 %v40, 2139095040
      %v367 = vshrl.u32 %v366, 23
      %v368 = vsub.s32 %v367, 127
      %v369 = vand.u32 2147483647, %v40
      %v370 = vand.u32 %v369, 8388607
      %v371 = vor.u32 %v370, 8388608
      %v372 = vsub.s32 0, %v371
      %v373 = vadd.s32 %v368, 1
      %vm374 = vcmp.gt.s32.totalorder %v373, 0
      %v375 = vsel %vm374, %v373, 0
      %v376 = vshrl.u32 %v375, 5
      %v377 = vand.u32 %v375, 31
      %v378 = vsub.s32 32, %v377
      %v379 = vshrl.u32 683565275, %v378
      %v380 = vshll.u32 683565275, %v377
      %v381 = vshrl.u32 2475754826, %v378
      %v382 = vor.u32 %v380, %v381
      %v383 = vshll.u32 2475754826, %v377
      %v384 = vshrl.u32 2131351028, %v378
      %v385 = vor.u32 %v383, %v384
      %v386 = vshll.u32 2131351028, %v377
      %v387 = vshrl.u32 2102212464, %v378
      %v388 = vor.u32 %v386, %v387
      %v389 = vshll.u32 2102212464, %v377
      %v390 = vshrl.u32 920167782, %v378
      %v391 = vor.u32 %v389, %v390
      %v392 = vshll.u32 920167782, %v377
      %v393 = vshrl.u32 1326507024, %v378
      %v394 = vor.u32 %v392, %v393
      %vm395 = vcmp.lt.s32.totalorder %v376, 1
      %vm396 = vcmp.lt.s32.totalorder %v376, 2
      %vm397 = vcmp.lt.s32.totalorder %v376, 3
      %vm398 = vcmp.lt.s32.totalorder %v376, 4
      %v399 = vsel %vm395, %v379, %v382
      %v400 = vsel %vm398, %v388, 2102212464
      %v401 = vsel %vm397, %v385, %v400
      %v402 = vsel %vm396, %v399, %v401
      %v403 = vsel %vm395, %v382, %v385
      %v404 = vsel %vm398, %v391, 920167782
      %v405 = vsel %vm397, %v388, %v404
      %v406 = vsel %vm396, %v403, %v405
      %v407 = vsel %vm395, %v385, %v388
      %v408 = vsel %vm398, %v394, 1326507024
      %v409 = vsel %vm397, %v391, %v408
      %v410 = vsel %vm396, %v407, %v409
      %v411 = vshll.u32 %v371, 8
      %v412 = vand.u32 %v411, 65535
      %v413 = vshrl.u32 %v411, 16
      %v414 = vand.u32 %v410, 65535
      %v415 = vshrl.u32 %v410, 16
      %v416 = vmul.u32 %v412, %v414
      %v417 = vmul.u32 %v412, %v415
      %v418 = vmul.u32 %v413, %v414
      %v419 = vmul.u32 %v413, %v415
      %v420 = vshll.u32 %v417, 16
      %v421 = vshrl.u32 %v417, 16
      %v422 = vshll.u32 %v418, 16
      %v423 = vshrl.u32 %v418, 16
      %vm424 = vc.u32 %v416, %v420
      %v425 = vsel %vm424, 1, 0
      %v426 = vadd.s32 %v416, %v420
      %v427 = vadd.s32 %v419, %v425
      %vm428 = vc.u32 %v426, %v422
      %v429 = vsel %vm428, 1, 0
      %v430 = vadd.s32 %v426, %v422
      %v431 = vadd.s32 %v427, %v429
      %v432 = vadd.s32 %v431, %v421
      %v433 = vadd.s32 %v432, %v423
      %v434 = vand.u32 %v411, 65535
      %v435 = vshrl.u32 %v411, 16
      %v436 = vand.u32 %v406, 65535
      %v437 = vshrl.u32 %v406, 16
      %v438 = vmul.u32 %v434, %v436
      %v439 = vmul.u32 %v434, %v437
      %v440 = vmul.u32 %v435, %v436
      %v441 = vmul.u32 %v435, %v437
      %v442 = vshll.u32 %v439, 16
      %v443 = vshrl.u32 %v439, 16
      %v444 = vshll.u32 %v440, 16
      %v445 = vshrl.u32 %v440, 16
      %vm446 = vc.u32 %v438, %v442
      %v447 = vsel %vm446, 1, 0
      %v448 = vadd.s32 %v438, %v442
      %v449 = vadd.s32 %v441, %v447
      %vm450 = vc.u32 %v448, %v444
      %v451 = vsel %vm450, 1, 0
      %v452 = vadd.s32 %v448, %v444
      %v453 = vadd.s32 %v449, %v451
      %v454 = vadd.s32 %v453, %v443
      %v455 = vadd.s32 %v454, %v445
      %v456 = vmul.u32 %v411, %v402
      %v457 = vadd.s32 %v433, %v452
      %vm458 = vc.u32 %v433, %v452
      %v459 = vadd.s32 %v455, 1
      %v460 = vsel %vm458, %v459, %v455
      %v461 = vadd.s32 %v456, %v460
      %v462 = vadd.s32 %v461, 536870912
      %v463 = vshrl.u32 %v462, 30
      %v464 = vshll.u32 %v463, 30
      %v465 = vsub.s32 %v461, %v464
      %vm466 = vcmp.lt.s32.totalorder %v465, 0
      %v467 = vsub.s32 0, %v465
      %v468 = vsel %vm466, %v467, %v465
      %v469 = vclz %v468
      %v470 = vsub.s32 %v469, 2
      %vm471 = vcmp.gt.s32.totalorder 0, %v470
      %v472 = vsel %vm471, 0, %v470
      %v473 = vsub.s32 32, %v472
      %v474 = vshll.u32 %v465, %v472
      %v475 = vshrl.u32 %v457, %v473
      %v476 = vor.u32 %v474, %v475
      %v477 = vsub.s32 4294967266, %v472
      %v478 = vadd.s32 %v477, 127
      %v479 = vshll.u32 %v478, 23
      %v480 = vor.u32 4788187, %v479
      %v481 = vand.u32 2147483647, %v480
      %v483 = vcvt.s32.f32 %v476
      %v484 = vmul.f32 %v483, %v481
      %v485 = vxor.u32 %v484, 2147483648
      %v486 = vsel %vm365, %v485, %v484
      %v487 = vsub.s32 4, %v463
      %v488 = vsel %vm365, %v487, %v463
      %v489 = vsel %vm364, %v40, %v486
      %v490 = vsel %vm364, 0, %v488
      %v491 = vmul.f32 %v489, %v489
      %v492 = vmul.f32 %v491, -0.001358992
      %v493 = vadd.f32 %v492, 0.041655596
      %v494 = vmul.f32 %v491, %v493
      %v495 = vadd.f32 %v494, -0.4999988
      %v496 = vmul.f32 %v491, %v495
      %v497 = vadd.f32 1.0, %v496
      %v498 = vmul.f32 %v489, %v489
      %v499 = vmul.f32 %v498, -0.00019511016
      %v500 = vadd.f32 %v499, 0.008332121
      %v501 = vmul.f32 %v498, %v500
      %v502 = vadd.f32 %v501, -0.16666654
      %v503 = vmul.f32 %v498, %v502
      %v504 = vadd.f32 %v503, 1.0
      %v505 = vmul.f32 %v504, %v489
      %vm506 = vweird.f32 %v40
      %v507 = vadd.s32 %v490, 3
      %v508 = vand.u32 %v507, 3
      %vm509 = vcmp.lt.s32.totalorder %v508, 2
      %vm510 = vcmp.eq.s32.totalorder %v508, 0
      %v511 = vxor.u32 %v505, 2147483648
      %v512 = vsel %vm510, %v497, %v511
      %vm513 = vcmp.eq.s32.totalorder %v508, 2
      %v514 = vxor.u32 %v497, 2147483648
      %v515 = vsel %vm513, %v514, %v505
      %v516 = vsel %vm509, %v512, %v515
      %v517 = vsel %vm506, nan, %v516
      %v518 = vand.u32 2147483647, %v40
      %vm519 = vcmp.le.f32.partialorder %v518, 0.7853982
      %vm520 = vcmp.lt.s32.totalorder %v40, 0
      %v521 = vand.u32 %v40, 2139095040
      %v522 = vshrl.u32 %v521, 23
      %v523 = vsub.s32 %v522, 127
      %v524 = vand.u32 2147483647, %v40
      %v525 = vand.u32 %v524, 8388607
      %v526 = vor.u32 %v525, 8388608
      %v527 = vsub.s32 0, %v526
      %v528 = vadd.s32 %v523, 1
      %vm529 = vcmp.gt.s32.totalorder %v528, 0
      %v530 = vsel %vm529, %v528, 0
      %v531 = vshrl.u32 %v530, 5
      %v532 = vand.u32 %v530, 31
      %v533 = vsub.s32 32, %v532
      %v534 = vshrl.u32 683565275, %v533
      %v535 = vshll.u32 683565275, %v532
      %v536 = vshrl.u32 2475754826, %v533
      %v537 = vor.u32 %v535, %v536
      %v538 = vshll.u32 2475754826, %v532
      %v539 = vshrl.u32 2131351028, %v533
      %v540 = vor.u32 %v538, %v539
      %v541 = vshll.u32 2131351028, %v532
      %v542 = vshrl.u32 2102212464, %v533
      %v543 = vor.u32 %v541, %v542
      %v544 = vshll.u32 2102212464, %v532
      %v545 = vshrl.u32 920167782, %v533
      %v546 = vor.u32 %v544, %v545
      %v547 = vshll.u32 920167782, %v532
      %v548 = vshrl.u32 1326507024, %v533
      %v549 = vor.u32 %v547, %v548
      %vm550 = vcmp.lt.s32.totalorder %v531, 1
      %vm551 = vcmp.lt.s32.totalorder %v531, 2
      %vm552 = vcmp.lt.s32.totalorder %v531, 3
      %vm553 = vcmp.lt.s32.totalorder %v531, 4
      %v554 = vsel %vm550, %v534, %v537
      %v555 = vsel %vm553, %v543, 2102212464
      %v556 = vsel %vm552, %v540, %v555
      %v557 = vsel %vm551, %v554, %v556
      %v558 = vsel %vm550, %v537, %v540
      %v559 = vsel %vm553, %v546, 920167782
      %v560 = vsel %vm552, %v543, %v559
      %v561 = vsel %vm551, %v558, %v560
      %v562 = vsel %vm550, %v540, %v543
      %v563 = vsel %vm553, %v549, 1326507024
      %v564 = vsel %vm552, %v546, %v563
      %v565 = vsel %vm551, %v562, %v564
      %v566 = vshll.u32 %v526, 8
      %v567 = vand.u32 %v566, 65535
      %v568 = vshrl.u32 %v566, 16
      %v569 = vand.u32 %v565, 65535
      %v570 = vshrl.u32 %v565, 16
      %v571 = vmul.u32 %v567, %v569
      %v572 = vmul.u32 %v567, %v570
      %v573 = vmul.u32 %v568, %v569
      %v574 = vmul.u32 %v568, %v570
      %v575 = vshll.u32 %v572, 16
      %v576 = vshrl.u32 %v572, 16
      %v577 = vshll.u32 %v573, 16
      %v578 = vshrl.u32 %v573, 16
      %vm579 = vc.u32 %v571, %v575
      %v580 = vsel %vm579, 1, 0
      %v581 = vadd.s32 %v571, %v575
      %v582 = vadd.s32 %v574, %v580
      %vm583 = vc.u32 %v581, %v577
      %v584 = vsel %vm583, 1, 0
      %v585 = vadd.s32 %v581, %v577
      %v586 = vadd.s32 %v582, %v584
      %v587 = vadd.s32 %v586, %v576
      %v588 = vadd.s32 %v587, %v578
      %v589 = vand.u32 %v566, 65535
      %v590 = vshrl.u32 %v566, 16
      %v591 = vand.u32 %v561, 65535
      %v592 = vshrl.u32 %v561, 16
      %v593 = vmul.u32 %v589, %v591
      %v594 = vmul.u32 %v589, %v592
      %v595 = vmul.u32 %v590, %v591
      %v596 = vmul.u32 %v590, %v592
      %v597 = vshll.u32 %v594, 16
      %v598 = vshrl.u32 %v594, 16
      %v599 = vshll.u32 %v595, 16
      %v600 = vshrl.u32 %v595, 16
      %vm601 = vc.u32 %v593, %v597
      %v602 = vsel %vm601, 1, 0
      %v603 = vadd.s32 %v593, %v597
      %v604 = vadd.s32 %v596, %v602
      %vm605 = vc.u32 %v603, %v599
      %v606 = vsel %vm605, 1, 0
      %v607 = vadd.s32 %v603, %v599
      %v608 = vadd.s32 %v604, %v606
      %v609 = vadd.s32 %v608, %v598
      %v610 = vadd.s32 %v609, %v600
      %v611 = vmul.u32 %v566, %v557
      %v612 = vadd.s32 %v588, %v607
      %vm613 = vc.u32 %v588, %v607
      %v614 = vadd.s32 %v610, 1
      %v615 = vsel %vm613, %v614, %v610
      %v616 = vadd.s32 %v611, %v615
      %v617 = vadd.s32 %v616, 536870912
      %v618 = vshrl.u32 %v617, 30
      %v619 = vshll.u32 %v618, 30
      %v620 = vsub.s32 %v616, %v619
      %vm621 = vcmp.lt.s32.totalorder %v620, 0
      %v622 = vsub.s32 0, %v620
      %v623 = vsel %vm621, %v622, %v620
      %v624 = vclz %v623
      %v625 = vsub.s32 %v624, 2
      %vm626 = vcmp.gt.s32.totalorder 0, %v625
      %v627 = vsel %vm626, 0, %v625
      %v628 = vsub.s32 32, %v627
      %v629 = vshll.u32 %v620, %v627
      %v630 = vshrl.u32 %v612, %v628
      %v631 = vor.u32 %v629, %v630
      %v632 = vsub.s32 4294967266, %v627
      %v633 = vadd.s32 %v632, 127
      %v634 = vshll.u32 %v633, 23
      %v635 = vor.u32 4788187, %v634
      %v636 = vand.u32 2147483647, %v635
      %v638 = vcvt.s32.f32 %v631
      %v639 = vmul.f32 %v638, %v636
      %v640 = vxor.u32 %v639, 2147483648
      %v641 = vsel %vm520, %v640, %v639
      %v642 = vsub.s32 4, %v618
      %v643 = vsel %vm520, %v642, %v618
      %v644 = vsel %vm519, %v40, %v641
      %v645 = vsel %vm519, 0, %v643
      %v646 = vmul.f32 %v644, %v644
      %v647 = vmul.f32 %v646, -0.001358992
      %v648 = vadd.f32 %v647, 0.041655596
      %v649 = vmul.f32 %v646, %v648
      %v650 = vadd.f32 %v649, -0.4999988
      %v651 = vmul.f32 %v646, %v650
      %v652 = vadd.f32 1.0, %v651
      %v653 = vmul.f32 %v644, %v644
      %v654 = vmul.f32 %v653, -0.00019511016
      %v655 = vadd.f32 %v654, 0.008332121
      %v656 = vmul.f32 %v653, %v655
      %v657 = vadd.f32 %v656, -0.16666654
      %v658 = vmul.f32 %v653, %v657
      %v659 = vadd.f32 %v658, 1.0
      %v660 = vmul.f32 %v659, %v644
      %vm661 = vweird.f32 %v40
      %v662 = vand.u32 %v645, 3
      %vm663 = vcmp.lt.s32.totalorder %v662, 2
      %vm664 = vcmp.eq.s32.totalorder %v662, 0
      %v665 = vxor.u32 %v660, 2147483648
      %v666 = vsel %vm664, %v652, %v665
      %vm667 = vcmp.eq.s32.totalorder %v662, 2
      %v668 = vxor.u32 %v652, 2147483648
      %v669 = vsel %vm667, %v668, %v660
      %v670 = vsel %vm663, %v666, %v669
      %v671 = vsel %vm661, nan, %v670
      %v673 = vperm.slane %v517, 0
      %v674 = vperm.slane %v517, 1
      %v678 = vperm.slane %v671, 0
      %v679 = vperm.slane %v671, 1
      %v682 = vsel %vm360, %v673, %v678
      %v683 = vsel %vm360, %v674, %v679
      %v686 = vrot.slane %v682, 6
      %v687 = vrot.slane %v683, 6
      %vm690 = vcmask 1041408
      %v691 = vsel %vm690, %v361, %v686
      %v692 = vsel %vm690, %v362, %v687
      %v695 = vrot.slane %v692, 4
      %vm696 = vcmask 1043456
      %v697 = vsel %vm696, %v691, %v695
      %699 = vst [vmem:[#allocation2] sm:$0xff] %v697
    $region13: #{tpu_custom_call.1} parent=1 // pred_fallthru
      _
    %v700 = vld [vmem:[#allocation2] sm:$0xff]
    %701 = vst [vmem:[#allocation6] sm:$0xff] %v700
    %702 = vst [vmem:[#allocation6 + $0x8] sm:$0xff] %v700
    // Predicated region
    $region14: #{tpu_custom_call.1} parent=1 // pred_check
      _
    $region15: #{tpu_custom_call.1} parent=1 // pred_check_branch
      %704 = sbr.rel (0) target = $region17
    $region16: #{tpu_custom_call.1} parent=1 // pred_region
      %706 = vsyncadd [#allocation5], 0
      %s707 = sshll.u32 [#allocation6], 4
      %s708 = int_to_ptr.vmem [resolvable:$true] %s707
      %s709 = sshll.u32 %s1, 4
      %s710 = int_to_ptr.hbm [resolvable:$true] %s709
      %715 = dma.vmem_to_hbm [thread:$0]  %s708, 256, %s710, [#allocation5], 128, 128, 8
    $region17: #{tpu_custom_call.1} parent=1 // pred_fallthru
      _
    // Predicated region
    $region18: #{tpu_custom_call.1} parent=1 // pred_check
      _
    $region19: #{tpu_custom_call.1} parent=1 // pred_check_branch
      %717 = sbr.rel (0) target = $region21
    $region20: #{tpu_custom_call.1} parent=1 // pred_region
      %719 = dma.done [#allocation5], 256
    $region21: #{tpu_custom_call.1} parent=1 // pred_fallthru
      _
    %720 = vsyncpa [#allocation4], 1
    %721 = vsyncpa [#allocation5], 1

</llo_original>
